<compile_context>
chip_gen: v7x
topology: tpu7x:2x2x1
jax: 0.10.0
libtpu: 0.0.40
codegen_flags: <defaults>
</compile_context>

<pallas_src>
import functools
import math

import jax
import jax.numpy as jnp
from jax.experimental import pallas as pl
from jax.experimental.pallas import tpu as pltpu


def _round_up(x: int, m: int) -> int:
    return ((x + m - 1) // m) * m


def _cdiv(a: int, b: int) -> int:
    return -(-a // b)


_NEG_INF = -1e30                       # bias for padded classes -> softmax weight 0
_HEADROOM_BYTES = 2 * 1024 * 1024      # compiler scratch headroom


def _vmem_budget_bytes() -> int:
    """Usable VMEM budget for this kernel's working set."""
    try:
        cap = int(pltpu.get_tpu_info().vmem_capacity_bytes)
    except Exception:
        cap = 64 * 1024 * 1024         # assume the smallest (v7x per-TC) VMEM
    return (cap * 3) // 4              # never claim the whole physical VMEM


def _softmax_rows(logits):
    # Numerically stable softmax with EXACT normalization (rows must sum to 1;
    # the divide is tiny VPU work next to the matmul / HBM traffic).
    mx = jnp.max(logits, axis=-1, keepdims=True)
    e = jnp.exp(logits - mx)
    return e / jnp.sum(e, axis=-1, keepdims=True)


def _small_kernel(m_ref, w_ref, b_ref, o_ref, *, mxu_dtype):
    # Whole class dimension resident: one MXU matmul + fused softmax.
    logits = (
        jnp.dot(m_ref[...].astype(mxu_dtype), w_ref[...],
                preferred_element_type=jnp.float32)
        + b_ref[...]
    )
    o_ref[...] = _softmax_rows(logits).astype(o_ref.dtype)


def _ctiled_kernel(m_ref, w_ref, b_ref, o_ref, logits_ref, *, mxu_dtype, tc):
    # Classes tiled along the innermost ("arbitrary") grid axis; logits for the
    # current batch tile accumulate into a VMEM scratch, softmax at the last step.
    j = pl.program_id(1)
    start = pl.multiple_of(j * tc, 128)
    logits_ref[:, pl.ds(start, tc)] = (
        jnp.dot(m_ref[...].astype(mxu_dtype), w_ref[...],
                preferred_element_type=jnp.float32)
        + b_ref[...]
    )

    @pl.when(j == pl.num_programs(1) - 1)
    def _():
        o_ref[...] = _softmax_rows(logits_ref[...]).astype(o_ref.dtype)
    # TODO(synk): for extreme num_classes where even a (tb, C_pad) f32 logits
    # row-block exceeds VMEM, switch to a two-pass / online softmax over C.


def class_encoder_forward(m, weight, bias, *, block_b=None, block_c=None,
                          mxu_dtype=None, force_pallas=False):
    """ClassEncoder forward: softmax(m @ weight + bias, axis=-1).

    m:      (B, shared_dim)
    weight: (shared_dim, num_classes)   (transpose of PyTorch nn.Linear.weight)
    bias:   (num_classes,)
    """
    B, D = m.shape
    Dw, C = weight.shape
    assert D == Dw and bias.shape == (C,)
    out_dtype = m.dtype

    # MXU feed dtype: bf16 when the input is already bf16 or the matmul is big
    # enough to be MXU-bound; exact f32 otherwise (matches the PyTorch module).
    if mxu_dtype is None:
        if m.dtype == jnp.bfloat16 or (D >= 512 and C >= 512):
            mxu_dtype = jnp.bfloat16
        else:
            mxu_dtype = m.dtype
    mxu_dtype = jnp.dtype(mxu_dtype)

    # Tiny problems: a Pallas launch (dispatch + pipeline prologue + lane
    # padding) is pure overhead; let XLA fuse it.
    if not force_pallas and B * max(D, C) <= 16384:
        logits = jnp.dot(m, weight, preferred_element_type=jnp.float32)
        logits = logits.astype(jnp.float32) + bias.astype(jnp.float32)
        return jax.nn.softmax(logits, axis=-1).astype(out_dtype)

    m_bytes = jnp.dtype(m.dtype).itemsize
    w_bytes = mxu_dtype.itemsize
    o_bytes = jnp.dtype(out_dtype).itemsize

    budget = _vmem_budget_bytes()
    C_pad = _round_up(C, 128)

    # Resident-weight path vs class-tiled path.
    resident_w_bytes = D * C_pad * w_bytes
    use_ctiled = (block_c is not None and block_c < C_pad) or (
        2 * resident_w_bytes > budget // 3)

    if not use_ctiled:
        tc = C_pad
        # Conservative working set: weight possibly double-buffered, bias, plus
        # per-row (m tile + out tile) double-buffered.
        fixed = 2 * resident_w_bytes + 2 * C_pad * 4 + _HEADROOM_BYTES
        per_row = 2 * (D * m_bytes + C_pad * o_bytes)
    else:
        if block_c is not None:
            tc = _round_up(min(block_c, C_pad), 128)
        else:
            tc = max(128, min(C_pad,
                              (((budget // 3) // (2 * D * w_bytes)) // 128) * 128))
        C_pad = _round_up(C, tc)
        fixed = 2 * D * tc * w_bytes + 2 * tc * 4 + _HEADROOM_BYTES
        per_row = 2 * D * m_bytes + 2 * C_pad * o_bytes + C_pad * 4  # + logits scratch

    sublane = {4: 8, 2: 16, 1: 32}.get(m_bytes, 8)
    tb_cap = max(sublane, (budget - fixed) // per_row)
    if block_b is not None:
        tb_cap = max(sublane, min(tb_cap, block_b))

    # MXU-friendly alignment when the batch is large; otherwise one sublane group.
    align = 256 if (B >= 512 and tb_cap >= 256) else sublane
    tb_cap = max(align, (tb_cap // align) * align)
    # At least 2 grid steps when B allows, so both v7x TensorCores get work.
    min_tiles = 2 if B >= 2 * align else 1
    n_tiles = max(min_tiles, _cdiv(B, tb_cap))
    tb = _round_up(_cdiv(B, n_tiles), align)      # <= tb_cap
    B_pad = _round_up(B, tb)

    # Only pad what actually needs padding (no extra HBM pass over m when aligned;
    # D is never padded: a full-extent block dim is layout-legal).
    m_p = m if B_pad == B else jnp.pad(m, ((0, B_pad - B), (0, 0)))
    w_p = weight.astype(mxu_dtype)
    b_p = bias.astype(jnp.float32)
    if C_pad != C:
        w_p = jnp.pad(w_p, ((0, 0), (0, C_pad - C)))
        b_p = jnp.pad(b_p, (0, C_pad - C), constant_values=_NEG_INF)
    b_p = b_p.reshape(1, C_pad)

    cost = pl.CostEstimate(
        flops=2 * B_pad * D * C_pad,
        transcendentals=B_pad * C_pad,
        bytes_accessed=(B_pad * D * m_bytes + D * C_pad * w_bytes
                        + B_pad * C_pad * o_bytes + C_pad * 4),
    )
    vmem_limit = int(min(budget + _HEADROOM_BYTES, 128 * 1024 * 1024))
    out_shape = jax.ShapeDtypeStruct((B_pad, C_pad), out_dtype)

    if not use_ctiled:
        kernel = functools.partial(_small_kernel, mxu_dtype=mxu_dtype)
        grid = (B_pad // tb,)
        dims = ("parallel",)
        scratch = ()
        out_spec = pl.BlockSpec((tb, C_pad), lambda i: (i, 0))

        def make_in_specs(single_buffer):
            # Weight / bias blocks are identical at every grid step -> a single
            # VMEM buffer is enough (double-buffering them is pure VMEM waste).
            const = dict(pipeline_mode=pl.Buffered(1)) if single_buffer else {}
            return [
                pl.BlockSpec((tb, D), lambda i: (i, 0)),            # m (pipelined)
                pl.BlockSpec((D, C_pad), lambda i: (0, 0), **const),  # weight
                pl.BlockSpec((1, C_pad), lambda i: (0, 0), **const),  # bias
            ]
    else:
        kernel = functools.partial(_ctiled_kernel, mxu_dtype=mxu_dtype, tc=tc)
        grid = (B_pad // tb, C_pad // tc)
        dims = ("parallel", "arbitrary")
        scratch = (pltpu.VMEM((tb, C_pad), jnp.float32),)            # logits rows
        out_spec = pl.BlockSpec((tb, C_pad), lambda i, j: (i, 0))    # resident over C

        def make_in_specs(single_buffer):
            del single_buffer  # weight/bias blocks change with j here
            return [
                pl.BlockSpec((tb, D), lambda i, j: (i, 0)),
                pl.BlockSpec((D, tc), lambda i, j: (0, j)),
                pl.BlockSpec((1, tc), lambda i, j: (0, j)),
            ]

    def launch(single_buffer):
        return pl.pallas_call(
            kernel,
            out_shape=out_shape,
            grid=grid,
            in_specs=make_in_specs(single_buffer),
            out_specs=out_spec,
            scratch_shapes=scratch,
            compiler_params=pltpu.CompilerParams(
                dimension_semantics=dims,
                vmem_limit_bytes=vmem_limit,
            ),
            cost_estimate=cost,
        )(m_p, w_p, b_p)

    try:
        out = launch(single_buffer=True)
    except Exception:
        # pl.Buffered(1) is a VMEM-only optimization; fall back to default
        # double-buffering if this jax version / backend rejects pipeline_mode.
        out = launch(single_buffer=False)

    return out[:B, :C]


def init_class_encoder_params(key, shared_dim, num_classes, dtype=jnp.float32):
    # Mimic nn.Linear default init: U(-1/sqrt(in), 1/sqrt(in)); deterministic.
    bound = 1.0 / math.sqrt(shared_dim)
    kw, kb = jax.random.split(key)
    # Stored already transposed: (shared_dim, num_classes).
    weight = jax.random.uniform(
        kw, (shared_dim, num_classes), dtype=dtype, minval=-bound, maxval=bound)
    bias = jax.random.uniform(
        kb, (num_classes,), dtype=dtype, minval=-bound, maxval=bound)
    return weight, bias


if __name__ == "__main__":
    key = jax.random.PRNGKey(0)
    ks = jax.random.split(key, 12)

    def reference(m, w, b):
        logits = jnp.dot(m.astype(jnp.float32), w.astype(jnp.float32),
                         precision=jax.lax.Precision.HIGHEST)
        return jax.nn.softmax(logits + b.astype(jnp.float32), axis=-1)

    def check(out, ref, B, C, atol, rtol):
        assert out.shape == (B, C)
        assert jnp.allclose(out.astype(jnp.float32), ref, atol=atol, rtol=rtol)
        assert jnp.allclose(jnp.sum(out.astype(jnp.float32), axis=-1), 1.0, atol=1e-3)

    # 1) Nominal small ClassEncoder shapes, forced through the Pallas kernel
    #    (exercises batch + class padding).
    B, D, C = 8, 32, 8
    m = jax.random.normal(ks[0], (B, D), dtype=jnp.float32)
    w, b = init_class_encoder_params(ks[1], D, C)
    out = jax.block_until_ready(class_encoder_forward(m, w, b, force_pallas=True))
    check(out, reference(m, w, b), B, C, 2e-3, 2e-3)

    # 2) Ragged shapes (batch pad + class pad, unpadded D=20).
    B, D, C = 13, 20, 5
    m = jax.random.normal(ks[2], (B, D), dtype=jnp.float32)
    w, b = init_class_encoder_params(ks[3], D, C)
    out = jax.block_until_ready(class_encoder_forward(m, w, b, force_pallas=True))
    check(out, reference(m, w, b), B, C, 2e-3, 2e-3)

    # 3) Aligned shapes: no padding at all, >= 2 pipelined batch tiles.
    B, D, C = 512, 128, 256
    m = jax.random.normal(ks[4], (B, D), dtype=jnp.float32)
    w, b = init_class_encoder_params(ks[5], D, C)
    out = jax.block_until_ready(class_encoder_forward(m, w, b))
    check(out, reference(m, w, b), B, C, 2e-3, 2e-3)

    # 4) Class-tiled path (innermost "arbitrary" axis over C, logits scratch).
    B, D, C = 256, 128, 512
    m = jax.random.normal(ks[6], (B, D), dtype=jnp.float32)
    w, b = init_class_encoder_params(ks[7], D, C)
    out = jax.block_until_ready(class_encoder_forward(m, w, b, block_c=128))
    check(out, reference(m, w, b), B, C, 2e-3, 2e-3)

    # 5) bf16 MXU feed (weight cast once, m tile cast in-kernel; f32 softmax).
    B, D, C = 64, 128, 256
    m = jax.random.normal(ks[8], (B, D), dtype=jnp.float32)
    w, b = init_class_encoder_params(ks[9], D, C)
    out = jax.block_until_ready(
        class_encoder_forward(m, w, b, mxu_dtype=jnp.bfloat16, force_pallas=True))
    check(out, reference(m, w, b), B, C, 5e-3, 5e-2)

    # 6) Tiny-problem XLA fallback path.
    B, D, C = 4, 16, 4
    m = jax.random.normal(ks[10], (B, D), dtype=jnp.float32)
    w, b = init_class_encoder_params(ks[11], D, C)
    out = jax.block_until_ready(class_encoder_forward(m, w, b))
    check(out, reference(m, w, b), B, C, 2e-3, 2e-3)

    print("KERNEL_OK")
</pallas_src>

<mosaic_0001>
module attributes {stable_mosaic.version = 11 : i64} {
  func.func @_small_kernel(%arg0: i32, %arg1: memref<8x32xf32, #tpu.memory_space<vmem>>, %arg2: memref<32x128xf32, #tpu.memory_space<vmem>>, %arg3: memref<1x128xf32, #tpu.memory_space<vmem>>, %arg4: memref<8x128xf32, #tpu.memory_space<vmem>>) attributes {dimension_semantics = [#tpu.dimension_semantics<parallel>], iteration_bounds = array<i64: 1>, scalar_prefetch = 0 : i64, scratch_operands = 0 : i64, tpu.core_type = #tpu.core_type<tc>, window_params = [{transform_indices = @transform_0, window_bounds = array<i64: 8, 32>}, {pipeline_mode = #tpu.pipeline_mode<synchronous>, transform_indices = @transform_1, window_bounds = array<i64: 32, 128>}, {pipeline_mode = #tpu.pipeline_mode<synchronous>, transform_indices = @transform_2, window_bounds = array<i64: 1, 128>}, {transform_indices = @transform_3, window_bounds = array<i64: 8, 128>}]} {
    %c0 = arith.constant 0 : index
    %c0_0 = arith.constant 0 : index
    %0 = vector.load %arg1[%c0, %c0_0] : memref<8x32xf32, #tpu.memory_space<vmem>>, vector<8x32xf32>
    %c0_1 = arith.constant 0 : index
    %c0_2 = arith.constant 0 : index
    %1 = vector.load %arg2[%c0_1, %c0_2] : memref<32x128xf32, #tpu.memory_space<vmem>>, vector<32x128xf32>
    %cst = arith.constant dense<0.000000e+00> : vector<8x128xf32>
    %2 = tpu.matmul %0, %1, %cst {dimension_numbers = #tpu.dot_dimension_numbers<[1], [0], [0], [1], [0, 0, 1, 1], [], []>} : vector<8x32xf32>, vector<32x128xf32>, vector<8x128xf32> -> vector<8x128xf32>
    %c0_3 = arith.constant 0 : index
    %c0_4 = arith.constant 0 : index
    %3 = vector.load %arg3[%c0_3, %c0_4] : memref<1x128xf32, #tpu.memory_space<vmem>>, vector<1x128xf32>
    %4 = vector.broadcast %3 : vector<1x128xf32> to vector<8x128xf32>
    %5 = arith.addf %2, %4 : vector<8x128xf32>
    %cst_5 = arith.constant dense<0xFF800000> : vector<8xf32>
    %6 = vector.multi_reduction <maximumf>, %5, %cst_5 [1] : vector<8x128xf32> to vector<8xf32>
    %7 = vector.shape_cast %6 : vector<8xf32> to vector<8x1xf32>
    %8 = vector.broadcast %7 : vector<8x1xf32> to vector<8x128xf32>
    %9 = arith.subf %5, %8 : vector<8x128xf32>
    %10 = math.exp %9 : vector<8x128xf32>
    %cst_6 = arith.constant dense<0.000000e+00> : vector<8xf32>
    %11 = vector.multi_reduction <add>, %10, %cst_6 [1] : vector<8x128xf32> to vector<8xf32>
    %12 = vector.shape_cast %11 : vector<8xf32> to vector<8x1xf32>
    %13 = vector.broadcast %12 : vector<8x1xf32> to vector<8x128xf32>
    %14 = arith.divf %10, %13 : vector<8x128xf32>
    %c0_7 = arith.constant 0 : index
    %c0_8 = arith.constant 0 : index
    %15 = vector.load %arg4[%c0_7, %c0_8] : memref<8x128xf32, #tpu.memory_space<vmem>>, vector<8x128xf32>
    tpu.vector_store %arg4[%c0_7, %c0_8], %14 {strides = array<i32>} : memref<8x128xf32, #tpu.memory_space<vmem>>, vector<8x128xf32>,
    return
  }
  func.func @transform_0(%arg0: i32) -> (i32, i32) {
    %c0_i32 = arith.constant 0 : i32
    %c0_i32_0 = arith.constant 0 : i32
    return %arg0, %c0_i32 : i32, i32
  }
  func.func @transform_1(%arg0: i32) -> (i32, i32) {
    %c0_i32 = arith.constant 0 : i32
    %c0_i32_0 = arith.constant 0 : i32
    %c0_i32_1 = arith.constant 0 : i32
    return %c0_i32, %c0_i32_0 : i32, i32
  }
  func.func @transform_2(%arg0: i32) -> (i32, i32) {
    %c0_i32 = arith.constant 0 : i32
    %c0_i32_0 = arith.constant 0 : i32
    %c0_i32_1 = arith.constant 0 : i32
    return %c0_i32, %c0_i32_0 : i32, i32
  }
  func.func @transform_3(%arg0: i32) -> (i32, i32) {
    %c0_i32 = arith.constant 0 : i32
    %c0_i32_0 = arith.constant 0 : i32
    return %arg0, %c0_i32 : i32, i32
  }
}

module attributes {stable_mosaic.version = 11 : i64} {
  func.func @_small_kernel(%arg0: i32, %arg1: memref<8x32xf32, #tpu.memory_space<vmem>>, %arg2: memref<32x128xf32, #tpu.memory_space<vmem>>, %arg3: memref<1x128xf32, #tpu.memory_space<vmem>>, %arg4: memref<8x128xf32, #tpu.memory_space<vmem>>) attributes {dimension_semantics = [#tpu.dimension_semantics<parallel>], iteration_bounds = array<i64: 1>, scalar_prefetch = 0 : i64, scratch_operands = 0 : i64, tpu.core_type = #tpu.core_type<tc>, window_params = [{transform_indices = @transform_0, window_bounds = array<i64: 8, 32>}, {pipeline_mode = #tpu.pipeline_mode<synchronous>, transform_indices = @transform_1, window_bounds = array<i64: 32, 128>}, {pipeline_mode = #tpu.pipeline_mode<synchronous>, transform_indices = @transform_2, window_bounds = array<i64: 1, 128>}, {transform_indices = @transform_3, window_bounds = array<i64: 8, 128>}]} {
    %c0 = arith.constant 0 : index
    %c0_0 = arith.constant 0 : index
    %0 = vector.load %arg1[%c0, %c0_0] : memref<8x32xf32, #tpu.memory_space<vmem>>, vector<8x32xf32>
    %c0_1 = arith.constant 0 : index
    %c0_2 = arith.constant 0 : index
    %1 = vector.load %arg2[%c0_1, %c0_2] : memref<32x128xf32, #tpu.memory_space<vmem>>, vector<32x128xf32>
    %cst = arith.constant dense<0.000000e+00> : vector<8x128xf32>
    %2 = tpu.matmul %0, %1, %cst {dimension_numbers = #tpu.dot_dimension_numbers<[1], [0], [0], [1], [0, 0, 1, 1], [], []>} : vector<8x32xf32>, vector<32x128xf32>, vector<8x128xf32> -> vector<8x128xf32>
    %c0_3 = arith.constant 0 : index
    %c0_4 = arith.constant 0 : index
    %3 = vector.load %arg3[%c0_3, %c0_4] : memref<1x128xf32, #tpu.memory_space<vmem>>, vector<1x128xf32>
    %4 = vector.broadcast %3 : vector<1x128xf32> to vector<8x128xf32>
    %5 = arith.addf %2, %4 : vector<8x128xf32>
    %cst_5 = arith.constant dense<0xFF800000> : vector<8xf32>
    %6 = vector.multi_reduction <maximumf>, %5, %cst_5 [1] : vector<8x128xf32> to vector<8xf32>
    %7 = vector.shape_cast %6 : vector<8xf32> to vector<8x1xf32>
    %8 = vector.broadcast %7 : vector<8x1xf32> to vector<8x128xf32>
    %9 = arith.subf %5, %8 : vector<8x128xf32>
    %10 = math.exp %9 : vector<8x128xf32>
    %cst_6 = arith.constant dense<0.000000e+00> : vector<8xf32>
    %11 = vector.multi_reduction <add>, %10, %cst_6 [1] : vector<8x128xf32> to vector<8xf32>
    %12 = vector.shape_cast %11 : vector<8xf32> to vector<8x1xf32>
    %13 = vector.broadcast %12 : vector<8x1xf32> to vector<8x128xf32>
    %14 = arith.divf %10, %13 : vector<8x128xf32>
    %c0_7 = arith.constant 0 : index
    %c0_8 = arith.constant 0 : index
    %15 = vector.load %arg4[%c0_7, %c0_8] : memref<8x128xf32, #tpu.memory_space<vmem>>, vector<8x128xf32>
    tpu.vector_store %arg4[%c0_7, %c0_8], %14 {strides = array<i32>} : memref<8x128xf32, #tpu.memory_space<vmem>>, vector<8x128xf32>,
    return
  }
  func.func @transform_0(%arg0: i32) -> (i32, i32) {
    %c0_i32 = arith.constant 0 : i32
    %c0_i32_0 = arith.constant 0 : i32
    return %arg0, %c0_i32 : i32, i32
  }
  func.func @transform_1(%arg0: i32) -> (i32, i32) {
    %c0_i32 = arith.constant 0 : i32
    %c0_i32_0 = arith.constant 0 : i32
    %c0_i32_1 = arith.constant 0 : i32
    return %c0_i32, %c0_i32_0 : i32, i32
  }
  func.func @transform_2(%arg0: i32) -> (i32, i32) {
    %c0_i32 = arith.constant 0 : i32
    %c0_i32_0 = arith.constant 0 : i32
    %c0_i32_1 = arith.constant 0 : i32
    return %c0_i32, %c0_i32_0 : i32, i32
  }
  func.func @transform_3(%arg0: i32) -> (i32, i32) {
    %c0_i32 = arith.constant 0 : i32
    %c0_i32_0 = arith.constant 0 : i32
    return %arg0, %c0_i32 : i32, i32
  }
}

</mosaic_0001>

<llo_original>
// kernel: tpu_custom_call.1
$region0: #{tpu_custom_call.1}
  #allocation0 [shape = 'u32[]', space=smem, size = 0x4, offset = 0x4, fixed_abs, tag = 'smem constant byte address 0x4 - core index']
  #allocation1 [shape = 'u32[144,128]{1,0:T(1,128)}', space=vmem, size = 0x12000, scoped, tag = 'internal scratch']
  %s0 = inlined_call_operand.hbm [shape: f32[8,32], index: 0, kind: input, shape index: {}]
  %s1 = inlined_call_operand.hbm [shape: f32[32,128], index: 1, kind: input, shape index: {}]
  %s2 = inlined_call_operand.vmem [shape: f32[1,128], index: 2, kind: input, shape index: {}]
  %s3 = inlined_call_operand.hbm [shape: f32[8,128], index: 3, kind: output, shape index: {}]
  %s4 = sld [smem:[#allocation0]]
  $region30: #{tpu_custom_call.1} parent=0
    _
  %s6 = ssub.s32 1, %s4
  %s7 = scalar_select 0, %s6, %s4
  $region1: #{tpu_custom_call.1} parent=0
    #allocation2 [shape = 'u8[4096]{0}', space=vmem, size = 0x1000, scoped, tag = 'input window, operand 0, single buffered']
    #allocation3 [shape = 's32[1]{0}', space=sflag, size = 0x4, scoped, tag = 'scoped memory for tpu_custom_call.1']
    #allocation4 [shape = 's32[1]{0}', space=sflag, size = 0x4, scoped, tag = 'scoped memory for tpu_custom_call.1']
    #allocation5 [shape = 'u8[16384]{0}', space=vmem, size = 0x4000, scoped, tag = 'input window, operand 1, single buffered']
    #allocation6 [shape = 's32[1]{0}', space=sflag, size = 0x4, scoped, tag = 'scoped memory for tpu_custom_call.1']
    #allocation7 [shape = 'u8[4096]{0}', space=vmem, size = 0x1000, scoped, tag = 'output window, operand 0, single buffered']
    %8 = vsyncpa [#allocation3], 0
    %9 = vsyncpa [#allocation6], 0
    %10 = vsyncpa [#allocation4], 0
    // Predicated region
    $region2: #{tpu_custom_call.1} parent=1 // pred_check
      _
    $region3: #{tpu_custom_call.1} parent=1 // pred_check_branch
      %12 = sbr.rel (0) target = $region5
    $region4: #{tpu_custom_call.1} parent=1 // pred_region
      %s14 = ssub.s32 128, 128
      %15 = vsyncadd [#allocation3], %s14
      %s17 = sshll.u32 [#allocation2], 4
      %s18 = int_to_ptr.vmem [resolvable:$true] %s17
      %20 = dma.hbm_to_vmem [thread:$0]  %s0, 128, %s18, [#allocation3]
    $region5: #{tpu_custom_call.1} parent=1 // pred_fallthru
      _
    // Predicated region
    $region6: #{tpu_custom_call.1} parent=1 // pred_check
      _
    $region7: #{tpu_custom_call.1} parent=1 // pred_check_branch
      %22 = sbr.rel (0) target = $region9
    $region8: #{tpu_custom_call.1} parent=1 // pred_region
      %s24 = ssub.s32 512, 512
      %25 = vsyncadd [#allocation6], %s24
      %s26 = sshll.u32 [#allocation5], 4
      %s27 = int_to_ptr.vmem [resolvable:$true] %s26
      %32 = dma.hbm_to_vmem [thread:$0]  %s1, 512, %s27, [#allocation6], 128, 128, 8
    $region9: #{tpu_custom_call.1} parent=1 // pred_fallthru
      _
    // Predicated region
    $region10: #{tpu_custom_call.1} parent=1 // pred_check
      _
    $region11: #{tpu_custom_call.1} parent=1 // pred_check_branch
      %34 = sbr.rel (0) target = $region13
    $region12: #{tpu_custom_call.1} parent=1 // pred_region
      _
    $region13: #{tpu_custom_call.1} parent=1 // pred_fallthru
      _
    // Predicated region
    $region14: #{tpu_custom_call.1} parent=1 // pred_check
      _
    $region15: #{tpu_custom_call.1} parent=1 // pred_check_branch
      %36 = sbr.rel (0) target = $region17
    $region16: #{tpu_custom_call.1} parent=1 // pred_region
      %37 = dma.done [#allocation3], 128
    $region17: #{tpu_custom_call.1} parent=1 // pred_fallthru
      _
    // Predicated region
    $region18: #{tpu_custom_call.1} parent=1 // pred_check
      _
    $region19: #{tpu_custom_call.1} parent=1 // pred_check_branch
      %39 = sbr.rel (0) target = $region21
    $region20: #{tpu_custom_call.1} parent=1 // pred_region
      %40 = dma.done [#allocation6], 512
    $region21: #{tpu_custom_call.1} parent=1 // pred_fallthru
      _
    %v41 = vld [vmem:[#allocation2] sm:$0xff]
    %v42 = vld [vmem:[#allocation5] sm:$0xff]
    %v43 = vld [vmem:[#allocation5 + $0x8] sm:$0xff]
    %v44 = vld [vmem:[#allocation5 + $0x10] sm:$0xff]
    %v45 = vld [vmem:[#allocation5 + $0x18] sm:$0xff]
    %v46 = vld [vmem:[%s2] sm:$0x1]
    %v48 = vlaneseq
    %v49 = vshrl.u32 %v48, 7
    %v50 = vsub.s32 0, %v49
    %v51 = vrot.slane %v46, %v50
    %vm53 = vcmask 261120
    %v55 = vsel %vm53, %v41, 0
    %57 = vmatprep.subr.mxu0 0.0
    %58 = vmatpush1.msra.mxu0 %v42
    %59 = vmatprep.subr.mxu0 0.0
    %60 = vmatpush1.msra.mxu0 %v43
    %61 = vmatprep.subr.mxu0 0.0
    %62 = vmatpush1.msra.mxu0 %v44
    %63 = vmatprep.subr.mxu0 0.0
    %64 = vmatpush1.msra.mxu0 %v45
    %65 = vmatprep.subr.mxu0 0.0
    %66 = vmatpush1.msra.mxu0 0.0
    %67 = vmatprep.subr.mxu0 0.0
    %68 = vmatpush1.msra.mxu0 0.0
    %69 = vmatprep.subr.mxu0 0.0
    %70 = vmatpush1.msra.mxu0 0.0
    %71 = vmatprep.subr.mxu0 0.0
    %72 = vmatpush1.msra.mxu0 0.0
    %73 = vmatprep.subr.mxu0 0.0
    %74 = vmatpush1.msra.mxu0 0.0
    %75 = vmatprep.subr.mxu0 0.0
    %76 = vmatpush1.msra.mxu0 0.0
    %77 = vmatprep.subr.mxu0 0.0
    %78 = vmatpush1.msra.mxu0 0.0
    %79 = vmatprep.subr.mxu0 0.0
    %80 = vmatpush1.msra.mxu0 0.0
    %81 = vmatprep.subr.mxu0 0.0
    %82 = vmatpush1.msra.mxu0 0.0
    %83 = vmatprep.subr.mxu0 0.0
    %84 = vmatpush1.msra.mxu0 0.0
    %85 = vmatprep.subr.mxu0 0.0
    %86 = vmatpush1.msra.mxu0 0.0
    %87 = vmatprep.subr.mxu0 0.0
    %88 = vmatpush1.msra.mxu0 0.0
    %89 = vmatprep.subr.mxu0 0.0
    %90 = vmatpush1.msra.mxu0 0.0
    %91 = vmatprep.subr.mxu0 0.0
    %92 = vmatpush1.msra.mxu0 0.0
    %93 = vmatprep.subr.mxu0 0.0
    %94 = vmatpush1.msra.mxu0 0.0
    %95 = vmatprep.subr.mxu0 0.0
    %96 = vmatpush1.msra.mxu0 0.0
    %97 = vmatprep.subr.mxu0 0.0
    %98 = vmatpush1.msra.mxu0 0.0
    %99 = vmatprep.subr.mxu0 0.0
    %100 = vmatpush1.msra.mxu0 0.0
    %101 = vmatprep.subr.mxu0 0.0
    %102 = vmatpush1.msra.mxu0 0.0
    %103 = vmatprep.subr.mxu0 0.0
    %104 = vmatpush1.msra.mxu0 0.0
    %105 = vmatprep.subr.mxu0 0.0
    %106 = vmatpush1.msra.mxu0 0.0
    %107 = vmatprep.subr.mxu0 0.0
    %108 = vmatpush1.msra.mxu0 0.0
    %109 = vmatprep.subr.mxu0 0.0
    %110 = vmatpush1.msra.mxu0 0.0
    %111 = vmatprep.subr.mxu0 0.0
    %112 = vmatpush1.msra.mxu0 0.0
    %113 = vmatprep.subr.mxu0 0.0
    %114 = vmatpush1.msra.mxu0 0.0
    %115 = vmatprep.subr.mxu0 0.0
    %116 = vmatpush1.msra.mxu0 0.0
    %117 = vmatprep.subr.mxu0 0.0
    %118 = vmatpush1.msra.mxu0 0.0
    %119 = vmatprep.subr.mxu0 0.0
    %120 = vmatpush1.msra.mxu0 0.0
    %121 = vmatprep.mubr.f32.mxu0 0.0
    %122 = vmatmul.mubr.f32.gmra.mrb[0].mxu0 %v55
    %v123 = vpop.f32.mrb[0].mxu0
    %v124 = vadd.f32 %v51, %v123
    %v125 = vpop.f32.mrb[0].mxu0
    %126 = vdwg.mxu0
    %127 = vmax.xlane.f32.xlu0 %v124
    %v128 = vpop.xlane.xlu0 %127
    %v129 = vsub.f32 %v124, %v128
    %v130 = vmul.f32 %v129, 1.442695
    %v131 = vpow.pop %v130
    %132 = vadd.xlane.f32.xlu0 %v131
    %v133 = vpop.xlane.xlu0 %132
    %v134 = vrcp.pop %v133
    %v135 = vmul.f32 %v131, %v134
    %136 = vst [vmem:[#allocation7] sm:$0xff] %v135
    // Predicated region
    $region22: #{tpu_custom_call.1} parent=1 // pred_check
      _
    $region23: #{tpu_custom_call.1} parent=1 // pred_check_branch
      %138 = sbr.rel (0) target = $region25
    $region24: #{tpu_custom_call.1} parent=1 // pred_region
      %s140 = ssub.s32 128, 128
      %141 = vsyncadd [#allocation4], %s140
      %s143 = sshll.u32 [#allocation7], 4
      %s144 = int_to_ptr.vmem [resolvable:$true] %s143
      %146 = dma.vmem_to_hbm [thread:$0]  %s144, 128, %s3, [#allocation4]
    $region25: #{tpu_custom_call.1} parent=1 // pred_fallthru
      _
    // Predicated region
    $region26: #{tpu_custom_call.1} parent=1 // pred_check
      _
    $region27: #{tpu_custom_call.1} parent=1 // pred_check_branch
      %148 = sbr.rel (0) target = $region29
    $region28: #{tpu_custom_call.1} parent=1 // pred_region
      %149 = dma.done [#allocation4], 128
    $region29: #{tpu_custom_call.1} parent=1 // pred_fallthru
      _
    %150 = vsyncpa [#allocation3], 1
    %151 = vsyncpa [#allocation6], 1
    %152 = vsyncpa [#allocation4], 1

// kernel: tpu_custom_call.1
$region0: #{tpu_custom_call.1}
  #allocation0 [shape = 'u32[]', space=smem, size = 0x4, offset = 0x4, fixed_abs, tag = 'smem constant byte address 0x4 - core index']
  #allocation1 [shape = 'u32[144,128]{1,0:T(1,128)}', space=vmem, size = 0x12000, scoped, tag = 'internal scratch']
  %s0 = inlined_call_operand.hbm [shape: f32[8,32], index: 0, kind: input, shape index: {}]
  %s1 = inlined_call_operand.hbm [shape: f32[32,128], index: 1, kind: input, shape index: {}]
  %s2 = inlined_call_operand.vmem [shape: f32[1,128], index: 2, kind: input, shape index: {}]
  %s3 = inlined_call_operand.hbm [shape: f32[8,128], index: 3, kind: output, shape index: {}]
  %s4 = sld [smem:[#allocation0]]
  $region30: #{tpu_custom_call.1} parent=0
    _
  %s6 = ssub.s32 1, %s4
  %s7 = scalar_select 0, %s6, %s4
  $region1: #{tpu_custom_call.1} parent=0
    #allocation2 [shape = 'u8[4096]{0}', space=vmem, size = 0x1000, scoped, tag = 'input window, operand 0, single buffered']
    #allocation3 [shape = 's32[1]{0}', space=sflag, size = 0x4, scoped, tag = 'scoped memory for tpu_custom_call.1']
    #allocation4 [shape = 's32[1]{0}', space=sflag, size = 0x4, scoped, tag = 'scoped memory for tpu_custom_call.1']
    #allocation5 [shape = 'u8[16384]{0}', space=vmem, size = 0x4000, scoped, tag = 'input window, operand 1, single buffered']
    #allocation6 [shape = 's32[1]{0}', space=sflag, size = 0x4, scoped, tag = 'scoped memory for tpu_custom_call.1']
    #allocation7 [shape = 'u8[4096]{0}', space=vmem, size = 0x1000, scoped, tag = 'output window, operand 0, single buffered']
    %8 = vsyncpa [#allocation3], 0
    %9 = vsyncpa [#allocation6], 0
    %10 = vsyncpa [#allocation4], 0
    // Predicated region
    $region2: #{tpu_custom_call.1} parent=1 // pred_check
      _
    $region3: #{tpu_custom_call.1} parent=1 // pred_check_branch
      %12 = sbr.rel (0) target = $region5
    $region4: #{tpu_custom_call.1} parent=1 // pred_region
      %s14 = ssub.s32 128, 128
      %15 = vsyncadd [#allocation3], %s14
      %s17 = sshll.u32 [#allocation2], 4
      %s18 = int_to_ptr.vmem [resolvable:$true] %s17
      %20 = dma.hbm_to_vmem [thread:$0]  %s0, 128, %s18, [#allocation3]
    $region5: #{tpu_custom_call.1} parent=1 // pred_fallthru
      _
    // Predicated region
    $region6: #{tpu_custom_call.1} parent=1 // pred_check
      _
    $region7: #{tpu_custom_call.1} parent=1 // pred_check_branch
      %22 = sbr.rel (0) target = $region9
    $region8: #{tpu_custom_call.1} parent=1 // pred_region
      %s24 = ssub.s32 512, 512
      %25 = vsyncadd [#allocation6], %s24
      %s26 = sshll.u32 [#allocation5], 4
      %s27 = int_to_ptr.vmem [resolvable:$true] %s26
      %32 = dma.hbm_to_vmem [thread:$0]  %s1, 512, %s27, [#allocation6], 128, 128, 8
    $region9: #{tpu_custom_call.1} parent=1 // pred_fallthru
      _
    // Predicated region
    $region10: #{tpu_custom_call.1} parent=1 // pred_check
      _
    $region11: #{tpu_custom_call.1} parent=1 // pred_check_branch
      %34 = sbr.rel (0) target = $region13
    $region12: #{tpu_custom_call.1} parent=1 // pred_region
      _
    $region13: #{tpu_custom_call.1} parent=1 // pred_fallthru
      _
    // Predicated region
    $region14: #{tpu_custom_call.1} parent=1 // pred_check
      _
    $region15: #{tpu_custom_call.1} parent=1 // pred_check_branch
      %36 = sbr.rel (0) target = $region17
    $region16: #{tpu_custom_call.1} parent=1 // pred_region
      %37 = dma.done [#allocation3], 128
    $region17: #{tpu_custom_call.1} parent=1 // pred_fallthru
      _
    // Predicated region
    $region18: #{tpu_custom_call.1} parent=1 // pred_check
      _
    $region19: #{tpu_custom_call.1} parent=1 // pred_check_branch
      %39 = sbr.rel (0) target = $region21
    $region20: #{tpu_custom_call.1} parent=1 // pred_region
      %40 = dma.done [#allocation6], 512
    $region21: #{tpu_custom_call.1} parent=1 // pred_fallthru
      _
    %v41 = vld [vmem:[#allocation2] sm:$0xff]
    %v42 = vld [vmem:[#allocation5] sm:$0xff]
    %v43 = vld [vmem:[#allocation5 + $0x8] sm:$0xff]
    %v44 = vld [vmem:[#allocation5 + $0x10] sm:$0xff]
    %v45 = vld [vmem:[#allocation5 + $0x18] sm:$0xff]
    %v46 = vld [vmem:[%s2] sm:$0x1]
    %v48 = vlaneseq
    %v49 = vshrl.u32 %v48, 7
    %v50 = vsub.s32 0, %v49
    %v51 = vrot.slane %v46, %v50
    %vm53 = vcmask 261120
    %v55 = vsel %vm53, %v41, 0
    %57 = vmatprep.subr.mxu0 0.0
    %58 = vmatpush1.msra.mxu0 %v42
    %59 = vmatprep.subr.mxu0 0.0
    %60 = vmatpush1.msra.mxu0 %v43
    %61 = vmatprep.subr.mxu0 0.0
    %62 = vmatpush1.msra.mxu0 %v44
    %63 = vmatprep.subr.mxu0 0.0
    %64 = vmatpush1.msra.mxu0 %v45
    %65 = vmatprep.subr.mxu0 0.0
    %66 = vmatpush1.msra.mxu0 0.0
    %67 = vmatprep.subr.mxu0 0.0
    %68 = vmatpush1.msra.mxu0 0.0
    %69 = vmatprep.subr.mxu0 0.0
    %70 = vmatpush1.msra.mxu0 0.0
    %71 = vmatprep.subr.mxu0 0.0
    %72 = vmatpush1.msra.mxu0 0.0
    %73 = vmatprep.subr.mxu0 0.0
    %74 = vmatpush1.msra.mxu0 0.0
    %75 = vmatprep.subr.mxu0 0.0
    %76 = vmatpush1.msra.mxu0 0.0
    %77 = vmatprep.subr.mxu0 0.0
    %78 = vmatpush1.msra.mxu0 0.0
    %79 = vmatprep.subr.mxu0 0.0
    %80 = vmatpush1.msra.mxu0 0.0
    %81 = vmatprep.subr.mxu0 0.0
    %82 = vmatpush1.msra.mxu0 0.0
    %83 = vmatprep.subr.mxu0 0.0
    %84 = vmatpush1.msra.mxu0 0.0
    %85 = vmatprep.subr.mxu0 0.0
    %86 = vmatpush1.msra.mxu0 0.0
    %87 = vmatprep.subr.mxu0 0.0
    %88 = vmatpush1.msra.mxu0 0.0
    %89 = vmatprep.subr.mxu0 0.0
    %90 = vmatpush1.msra.mxu0 0.0
    %91 = vmatprep.subr.mxu0 0.0
    %92 = vmatpush1.msra.mxu0 0.0
    %93 = vmatprep.subr.mxu0 0.0
    %94 = vmatpush1.msra.mxu0 0.0
    %95 = vmatprep.subr.mxu0 0.0
    %96 = vmatpush1.msra.mxu0 0.0
    %97 = vmatprep.subr.mxu0 0.0
    %98 = vmatpush1.msra.mxu0 0.0
    %99 = vmatprep.subr.mxu0 0.0
    %100 = vmatpush1.msra.mxu0 0.0
    %101 = vmatprep.subr.mxu0 0.0
    %102 = vmatpush1.msra.mxu0 0.0
    %103 = vmatprep.subr.mxu0 0.0
    %104 = vmatpush1.msra.mxu0 0.0
    %105 = vmatprep.subr.mxu0 0.0
    %106 = vmatpush1.msra.mxu0 0.0
    %107 = vmatprep.subr.mxu0 0.0
    %108 = vmatpush1.msra.mxu0 0.0
    %109 = vmatprep.subr.mxu0 0.0
    %110 = vmatpush1.msra.mxu0 0.0
    %111 = vmatprep.subr.mxu0 0.0
    %112 = vmatpush1.msra.mxu0 0.0
    %113 = vmatprep.subr.mxu0 0.0
    %114 = vmatpush1.msra.mxu0 0.0
    %115 = vmatprep.subr.mxu0 0.0
    %116 = vmatpush1.msra.mxu0 0.0
    %117 = vmatprep.subr.mxu0 0.0
    %118 = vmatpush1.msra.mxu0 0.0
    %119 = vmatprep.subr.mxu0 0.0
    %120 = vmatpush1.msra.mxu0 0.0
    %121 = vmatprep.mubr.f32.mxu0 0.0
    %122 = vmatmul.mubr.f32.gmra.mrb[0].mxu0 %v55
    %v123 = vpop.f32.mrb[0].mxu0
    %v124 = vadd.f32 %v51, %v123
    %v125 = vpop.f32.mrb[0].mxu0
    %126 = vdwg.mxu0
    %127 = vmax.xlane.f32.xlu0 %v124
    %v128 = vpop.xlane.xlu0 %127
    %v129 = vsub.f32 %v124, %v128
    %v130 = vmul.f32 %v129, 1.442695
    %v131 = vpow.pop %v130
    %132 = vadd.xlane.f32.xlu0 %v131
    %v133 = vpop.xlane.xlu0 %132
    %v134 = vrcp.pop %v133
    %v135 = vmul.f32 %v131, %v134
    %136 = vst [vmem:[#allocation7] sm:$0xff] %v135
    // Predicated region
    $region22: #{tpu_custom_call.1} parent=1 // pred_check
      _
    $region23: #{tpu_custom_call.1} parent=1 // pred_check_branch
      %138 = sbr.rel (0) target = $region25
    $region24: #{tpu_custom_call.1} parent=1 // pred_region
      %s140 = ssub.s32 128, 128
      %141 = vsyncadd [#allocation4], %s140
      %s143 = sshll.u32 [#allocation7], 4
      %s144 = int_to_ptr.vmem [resolvable:$true] %s143
      %146 = dma.vmem_to_hbm [thread:$0]  %s144, 128, %s3, [#allocation4]
    $region25: #{tpu_custom_call.1} parent=1 // pred_fallthru
      _
    // Predicated region
    $region26: #{tpu_custom_call.1} parent=1 // pred_check
      _
    $region27: #{tpu_custom_call.1} parent=1 // pred_check_branch
      %148 = sbr.rel (0) target = $region29
    $region28: #{tpu_custom_call.1} parent=1 // pred_region
      %149 = dma.done [#allocation4], 128
    $region29: #{tpu_custom_call.1} parent=1 // pred_fallthru
      _
    %150 = vsyncpa [#allocation3], 1
    %151 = vsyncpa [#allocation6], 1
    %152 = vsyncpa [#allocation4], 1

</llo_original>
